<compile_context>
chip_gen: v7x
topology: tpu7x:2x2x1
jax: 0.10.0
libtpu: 0.0.40
codegen_flags: <defaults>
</compile_context>

<pallas_src>
import functools

import jax
import jax.numpy as jnp
from jax.experimental import pallas as pl
from jax.experimental.pallas import tpu as pltpu

BN_EPS = 1e-5


def _vmem_limit_bytes():
    """Generation-aware VMEM limit: ~3/4 of capacity, capped at 100 MiB."""
    cap = 128 * 1024 * 1024
    try:
        cap = getattr(pltpu.get_tpu_info(), "vmem_capacity_bytes", cap)
    except Exception:  # API/hardware query unavailable -> conservative default
        pass
    return int(max(32 * 1024 * 1024, min(cap * 3 // 4, 100 * 1024 * 1024)))


_ROW_TILES = (1024, 512, 256, 128, 64, 32, 16, 8)


def _pick_matmul_tile(n, d_in, d_out, vmem_limit):
    """Largest row tile (preferring 256-multiples for the bf16 MXU) whose
    double-buffered x/y tiles fit next to the resident bf16 weight block."""
    w_bytes = 2 * 2 * d_in * d_out  # bf16 W, assume double-buffered
    budget = max(vmem_limit - w_bytes, 4 * 1024 * 1024)
    for tn in _ROW_TILES:
        if n % tn:
            continue
        per_step = 2 * 2 * tn * (d_in + d_out) + 4 * tn * d_out  # bf16 dbuf + f32 temp
        if per_step <= budget:
            return tn
    return n


def _pick_bn_tile(n, d_out, vmem_limit):
    """Phase 2 is pure HBM streaming: use much larger row tiles than phase 1."""
    for tn in (4096, 2048, 1024, 512, 256, 128, 64, 32, 16, 8):
        if n % tn:
            continue
        per_step = 2 * 2 * 2 * tn * d_out  # bf16 in + out, double-buffered
        if per_step <= vmem_limit // 2:
            return tn
    return n


def _matmul_stats_kernel(x_ref, w_ref, b_ref, y_ref, stats_ref):
    """Phase 1: y = x @ W + b for one row tile, plus per-tile partial stats."""
    # bf16 operands straight into the MXU, f32 accumulation.
    y = jnp.dot(x_ref[...], w_ref[...], preferred_element_type=jnp.float32)
    y = y + b_ref[...].astype(jnp.float32)
    y_ref[...] = y.astype(y_ref.dtype)

    # Partial statistics from the f32 result (before the bf16 cast), written
    # with a single full-block store; no cross-tile accumulator -> 'parallel'.
    tile_sum = jnp.sum(y, axis=0, keepdims=True)
    tile_sumsq = jnp.sum(y * y, axis=0, keepdims=True)
    stats_ref[...] = jnp.concatenate([tile_sum, tile_sumsq], axis=0)[None]


def _bn_relu_kernel(y_ref, stats_ref, gb_ref, o_ref, *, inv_n):
    """Phase 2: fold BN to scale/shift on-chip and apply + ReLU in place."""
    mean = stats_ref[0:1, :] * inv_n
    var = stats_ref[1:2, :] * inv_n - mean * mean
    var = jnp.maximum(var, 0.0)                              # f32 cancellation guard
    scale = gb_ref[0:1, :] * jax.lax.rsqrt(var + BN_EPS)     # rsqrt -> EUP slot
    shift = gb_ref[1:2, :] - mean * scale
    y = y_ref[...].astype(jnp.float32)
    o_ref[...] = jnp.maximum(y * scale + shift, 0.0).astype(o_ref.dtype)


def node_transform(x, w, b, gamma, beta, *, row_tile=None, bn_row_tile=None,
                   out_dtype=jnp.bfloat16):
    """x: (N, D_in), w: (D_in, D_out) (PyTorch Linear weight pre-transposed),
    b/gamma/beta: (1, D_out).  Returns relu(batchnorm(x @ w + b))."""
    n, d_in = x.shape
    d_out = w.shape[1]
    vmem_limit = _vmem_limit_bytes()

    # bf16 MXU operands (fast path on v5e/v6e/v7x, halves x/W DMA bytes);
    # all accumulation and BN math stay in f32.
    x_bf = x.astype(jnp.bfloat16)
    w_bf = w.astype(jnp.bfloat16)
    b_f32 = b.reshape(1, d_out).astype(jnp.float32)

    tn = _pick_matmul_tile(n, d_in, d_out, vmem_limit) if row_tile is None else row_tile
    assert n % tn == 0, "row_tile must divide N"
    n_tiles = n // tn

    # ---- Phase 1: matmul + per-tile partial batch statistics ----------------
    y, part_stats = pl.pallas_call(
        _matmul_stats_kernel,
        out_shape=(
            jax.ShapeDtypeStruct((n, d_out), jnp.bfloat16),
            jax.ShapeDtypeStruct((n_tiles, 2, d_out), jnp.float32),
        ),
        grid=(n_tiles,),
        in_specs=[
            pl.BlockSpec((tn, d_in), lambda i: (i, 0)),        # streamed x tiles
            pl.BlockSpec((d_in, d_out), lambda i: (0, 0)),     # W resident across grid
            pl.BlockSpec((1, d_out), lambda i: (0, 0)),        # bias resident
        ],
        out_specs=(
            pl.BlockSpec((tn, d_out), lambda i: (i, 0)),       # bf16 y tiles
            pl.BlockSpec((1, 2, d_out), lambda i: (i, 0, 0)),  # per-tile stats
        ),
        compiler_params=pltpu.CompilerParams(
            # No cross-tile carry -> fully parallel; shards across TCs on v7x.
            dimension_semantics=("parallel",),
            vmem_limit_bytes=vmem_limit,
        ),
        cost_estimate=pl.CostEstimate(
            flops=2 * n * d_in * d_out + 4 * n * d_out,
            transcendentals=0,
            bytes_accessed=2 * (n * d_in + d_in * d_out + n * d_out)
            + 4 * (d_out + n_tiles * 2 * d_out),
        ),
    )(x_bf, w_bf, b_f32)

    # ---- Tiny XLA reduction over the tile axis -------------------------------
    stats = jnp.sum(part_stats, axis=0)                        # (2, D_out) f32
    gb = jnp.concatenate(
        [gamma.reshape(1, d_out), beta.reshape(1, d_out)], axis=0
    ).astype(jnp.float32)                                       # (2, D_out)

    # ---- Phase 2: BN fold + scale/shift + ReLU, in place over y --------------
    tn2 = _pick_bn_tile(n, d_out, vmem_limit) if bn_row_tile is None else bn_row_tile
    assert n % tn2 == 0, "bn_row_tile must divide N"
    alias = {0: 0} if jnp.dtype(out_dtype) == jnp.dtype(jnp.bfloat16) else {}

    out = pl.pallas_call(
        functools.partial(_bn_relu_kernel, inv_n=1.0 / n),
        out_shape=jax.ShapeDtypeStruct((n, d_out), out_dtype),
        grid=(n // tn2,),
        in_specs=[
            pl.BlockSpec((tn2, d_out), lambda i: (i, 0)),      # streamed y tiles
            pl.BlockSpec((2, d_out), lambda i: (0, 0)),        # raw stats resident
            pl.BlockSpec((2, d_out), lambda i: (0, 0)),        # gamma/beta resident
        ],
        out_specs=pl.BlockSpec((tn2, d_out), lambda i: (i, 0)),
        input_output_aliases=alias,                             # overwrite y in place
        compiler_params=pltpu.CompilerParams(
            dimension_semantics=("parallel",),
            vmem_limit_bytes=vmem_limit,
        ),
        cost_estimate=pl.CostEstimate(
            flops=3 * n * d_out,
            transcendentals=d_out,
            bytes_accessed=2 * n * d_out
            + jnp.dtype(out_dtype).itemsize * n * d_out + 4 * 4 * d_out,
        ),
    )(y, stats, gb)
    return out


def node_transform_ref(x, w, b, gamma, beta):
    h = x.astype(jnp.float32) @ w.astype(jnp.float32) + b
    mean = jnp.mean(h, axis=0, keepdims=True)
    var = jnp.mean((h - mean) ** 2, axis=0, keepdims=True)
    h = (h - mean) / jnp.sqrt(var + BN_EPS) * gamma + beta
    return jnp.maximum(h, 0.0)


if __name__ == "__main__":
    # Small, lane-dense problem (feature dims multiples of 128).  Explicit
    # small row tiles are used only to exercise multiple grid steps of both
    # phases; the production path auto-picks larger, generation-aware tiles.
    N, D_IN, D_OUT = 256, 128, 128

    key = jax.random.PRNGKey(0)
    kx, kw, kb, kg, kbeta = jax.random.split(key, 5)

    x = jax.random.normal(kx, (N, D_IN), dtype=jnp.float32)
    # PyTorch Linear weight is (out, in); stored pre-transposed as (in, out).
    w = jax.random.normal(kw, (D_IN, D_OUT), dtype=jnp.float32) * (1.0 / jnp.sqrt(D_IN))
    b = jax.random.normal(kb, (1, D_OUT), dtype=jnp.float32) * 0.1
    gamma = 1.0 + 0.1 * jax.random.normal(kg, (1, D_OUT), dtype=jnp.float32)
    beta = 0.1 * jax.random.normal(kbeta, (1, D_OUT), dtype=jnp.float32)

    out = node_transform(x, w, b, gamma, beta, row_tile=64, bn_row_tile=128)
    jax.block_until_ready(out)

    ref = node_transform_ref(x, w, b, gamma, beta)
    assert out.shape == (N, D_OUT)
    # bf16 MXU operands + bf16 intermediate/output -> relaxed tolerance vs f32 ref.
    assert jnp.allclose(out.astype(jnp.float32), ref, atol=5e-2, rtol=5e-2), \
        "mismatch vs reference"

    print("KERNEL_OK")
</pallas_src>

<mosaic_0001>
module attributes {stable_mosaic.version = 11 : i64} {
  func.func @_matmul_stats_kernel(%arg0: i32, %arg1: memref<64x128xbf16, #tpu.memory_space<vmem>>, %arg2: memref<128x128xbf16, #tpu.memory_space<vmem>>, %arg3: memref<1x128xf32, #tpu.memory_space<vmem>>, %arg4: memref<64x128xbf16, #tpu.memory_space<vmem>>, %arg5: memref<1x2x128xf32, #tpu.memory_space<vmem>>) attributes {dimension_semantics = [#tpu.dimension_semantics<parallel>], iteration_bounds = array<i64: 4>, scalar_prefetch = 0 : i64, scratch_operands = 0 : i64, tpu.core_type = #tpu.core_type<tc>, window_params = [{transform_indices = @transform_0, window_bounds = array<i64: 64, 128>}, {pipeline_mode = #tpu.pipeline_mode<synchronous>, transform_indices = @transform_1, window_bounds = array<i64: 128, 128>}, {pipeline_mode = #tpu.pipeline_mode<synchronous>, transform_indices = @transform_2, window_bounds = array<i64: 1, 128>}, {transform_indices = @transform_3, window_bounds = array<i64: 64, 128>}, {transform_indices = @transform_4, window_bounds = array<i64: 1, 2, 128>}]} {
    %c0 = arith.constant 0 : index
    %c0_0 = arith.constant 0 : index
    %0 = vector.load %arg1[%c0, %c0_0] : memref<64x128xbf16, #tpu.memory_space<vmem>>, vector<64x128xbf16>
    %c0_1 = arith.constant 0 : index
    %c0_2 = arith.constant 0 : index
    %1 = vector.load %arg2[%c0_1, %c0_2] : memref<128x128xbf16, #tpu.memory_space<vmem>>, vector<128x128xbf16>
    %cst = arith.constant dense<0.000000e+00> : vector<64x128xf32>
    %2 = tpu.matmul %0, %1, %cst {dimension_numbers = #tpu.dot_dimension_numbers<[1], [0], [0], [1], [0, 0, 1, 1], [], []>} : vector<64x128xbf16>, vector<128x128xbf16>, vector<64x128xf32> -> vector<64x128xf32>
    %c0_3 = arith.constant 0 : index
    %c0_4 = arith.constant 0 : index
    %3 = vector.load %arg3[%c0_3, %c0_4] : memref<1x128xf32, #tpu.memory_space<vmem>>, vector<1x128xf32>
    %4 = vector.broadcast %3 : vector<1x128xf32> to vector<64x128xf32>
    %5 = arith.addf %2, %4 : vector<64x128xf32>
    %6 = arith.truncf %5 : vector<64x128xf32> to vector<64x128xbf16>
    %c0_5 = arith.constant 0 : index
    %c0_6 = arith.constant 0 : index
    %7 = vector.load %arg4[%c0_5, %c0_6] : memref<64x128xbf16, #tpu.memory_space<vmem>>, vector<64x128xbf16>
    tpu.vector_store %arg4[%c0_5, %c0_6], %6 {strides = array<i32>} : memref<64x128xbf16, #tpu.memory_space<vmem>>, vector<64x128xbf16>,
    %cst_7 = arith.constant dense<0.000000e+00> : vector<128xf32>
    %8 = vector.multi_reduction <add>, %5, %cst_7 [0] : vector<64x128xf32> to vector<128xf32>
    %9 = vector.shape_cast %8 : vector<128xf32> to vector<1x128xf32>
    %10 = arith.mulf %5, %5 : vector<64x128xf32>
    %cst_8 = arith.constant dense<0.000000e+00> : vector<128xf32>
    %11 = vector.multi_reduction <add>, %10, %cst_8 [0] : vector<64x128xf32> to vector<128xf32>
    %12 = vector.shape_cast %11 : vector<128xf32> to vector<1x128xf32>
    %13 = tpu.concatenate %9, %12 in 0 : vector<1x128xf32>, vector<1x128xf32> -> vector<2x128xf32>
    %14 = vector.shape_cast %13 : vector<2x128xf32> to vector<1x2x128xf32>
    %c0_9 = arith.constant 0 : index
    %c0_10 = arith.constant 0 : index
    %c0_11 = arith.constant 0 : index
    %15 = vector.load %arg5[%c0_9, %c0_10, %c0_11] : memref<1x2x128xf32, #tpu.memory_space<vmem>>, vector<1x2x128xf32>
    tpu.vector_store %arg5[%c0_9, %c0_10, %c0_11], %14 {strides = array<i32>} : memref<1x2x128xf32, #tpu.memory_space<vmem>>, vector<1x2x128xf32>,
    return
  }
  func.func @transform_0(%arg0: i32) -> (i32, i32) {
    %c0_i32 = arith.constant 0 : i32
    %c0_i32_0 = arith.constant 0 : i32
    return %arg0, %c0_i32 : i32, i32
  }
  func.func @transform_1(%arg0: i32) -> (i32, i32) {
    %c0_i32 = arith.constant 0 : i32
    %c0_i32_0 = arith.constant 0 : i32
    %c0_i32_1 = arith.constant 0 : i32
    return %c0_i32, %c0_i32_0 : i32, i32
  }
  func.func @transform_2(%arg0: i32) -> (i32, i32) {
    %c0_i32 = arith.constant 0 : i32
    %c0_i32_0 = arith.constant 0 : i32
    %c0_i32_1 = arith.constant 0 : i32
    return %c0_i32, %c0_i32_0 : i32, i32
  }
  func.func @transform_3(%arg0: i32) -> (i32, i32) {
    %c0_i32 = arith.constant 0 : i32
    %c0_i32_0 = arith.constant 0 : i32
    return %arg0, %c0_i32 : i32, i32
  }
  func.func @transform_4(%arg0: i32) -> (i32, i32, i32) {
    %c0_i32 = arith.constant 0 : i32
    %c0_i32_0 = arith.constant 0 : i32
    %c0_i32_1 = arith.constant 0 : i32
    return %arg0, %c0_i32, %c0_i32_0 : i32, i32, i32
  }
}

</mosaic_0001>

<llo_original>
// kernel: tpu_custom_call.1
$region0: #{tpu_custom_call.1}
  #allocation0 [shape = 'u32[]', space=smem, size = 0x4, offset = 0x4, fixed_abs, tag = 'smem constant byte address 0x4 - core index']
  #allocation1 [shape = 'u32[144,128]{1,0:T(1,128)}', space=vmem, size = 0x12000, scoped, tag = 'internal scratch']
  %s0 = inlined_call_operand.hbm [shape: bf16[256,128], index: 0, kind: input, shape index: {}]
  %s1 = inlined_call_operand.hbm [shape: bf16[128,128], index: 1, kind: input, shape index: {}]
  %s2 = inlined_call_operand.hbm [shape: f32[1,128], index: 2, kind: input, shape index: {}]
  %s3 = inlined_call_operand.hbm [shape: bf16[256,128], index: 3, kind: output, shape index: {0}]
  %s4 = inlined_call_operand.hbm [shape: f32[4,2,128], index: 4, kind: output, shape index: {1}]
  %5 = xla_tuple %s3, %s4
  %s6 = sld [smem:[#allocation0]]
  $region65: #{tpu_custom_call.1} parent=0
    _
  %s8 = ssub.s32 1, %s6
  %s9 = scalar_select 0, %s8, %s6
  $region1: #{tpu_custom_call.1} parent=0
    #allocation2 [shape = 'u8[32768]{0}', space=vmem, size = 0x8000, scoped, tag = 'input window, operand 0']
    #allocation3 [shape = 's32[2]{0}', space=sflag, size = 0x8, scoped, tag = 'scoped memory for tpu_custom_call.1']
    #allocation4 [shape = 's32[2]{0}', space=sflag, size = 0x8, scoped, tag = 'scoped memory for tpu_custom_call.1']
    #allocation5 [shape = 'u8[32768]{0}', space=vmem, size = 0x8000, scoped, tag = 'input window, operand 1, single buffered']
    #allocation6 [shape = 's32[1]{0}', space=sflag, size = 0x4, scoped, tag = 'scoped memory for tpu_custom_call.1']
    #allocation7 [shape = 'u8[512]{0}', space=vmem, size = 0x400, scoped, tag = 'input window, operand 2, single buffered']
    #allocation8 [shape = 'u8[32768]{0}', space=vmem, size = 0x8000, scoped, tag = 'output window, operand 0']
    #allocation9 [shape = 'u8[2048]{0}', space=vmem, size = 0x800, scoped, tag = 'output window, operand 1']
    #allocation10 [shape = 's32[2]{0}', space=sflag, size = 0x8, scoped, tag = 'scoped memory for tpu_custom_call.1']
    %10 = vsyncpa [#allocation3], 0
    %s11 = scalar_lea.sflag [#allocation3], 1
    %12 = vsyncpa %s11, 0
    %13 = vsyncpa [#allocation6], 0
    %14 = vsyncpa [#allocation4], 0
    %s15 = scalar_lea.sflag [#allocation4], 1
    %16 = vsyncpa %s15, 0
    %17 = vsyncpa [#allocation10], 0
    %s18 = scalar_lea.sflag [#allocation10], 1
    %19 = vsyncpa %s18, 0
    loop: start=0, step=1, limit=6
    $region2: #{tpu_custom_call.1} parent=1 // loop_pre_header
      _
    $region3: #{tpu_custom_call.1} parent=1 // loop_header
      %s21 = sphi 0, %s25
      %p22 = scmp.ge.s32.totalorder %s21, 6
      %s31 = sphi 0, %s33
      %s34 = sphi 0, %s31
      %s35 = sphi 0, %s34
      %s51 = sphi 0, %s35
      %s55 = sphi 0, %s55
      %s57 = sphi 0, %s55
      %s58 = sphi 0, %s57
      %s72 = sphi 0, %s58
      %s76 = sphi 0, %s76
      %s78 = sphi 0, %s76
      %s79 = sphi 0, %s78
      %s93 = sphi 0, %s79
      %s99 = sphi 0, %s101
      %s102 = sphi 0, %s99
      %s103 = sphi 0, %s102
      %s119 = sphi 0, %s103
      %s125 = sphi 0, %s127
      %s128 = sphi 0, %s125
      %s129 = sphi 0, %s128
      %s145 = sphi 0, %s129
    $region4: #{tpu_custom_call.1} parent=1 // loop_header_branch
      %24 = sbr.rel (%p22) target = $region8
    $region5: #{tpu_custom_call.1} parent=1 // loop_body
      %s26 = ssub.s32 %s21, 1
      %s27 = ssub.s32 %s21, 2
      %s28 = sadd.s32 %s21, 1
      %s29 = ssub.s32 %s21, %s28
      %p30 = scmp.eq.s32.totalorder %s29, 0
      %s32 = sadd.s32 %s31, 1
      %s33 = scalar_select %p30, %s31, %s32
      %p36 = pneg %p30
      %p37 = scmp.eq.s32.totalorder %s21, 3
      %p38 = por %p36, %p37
      %p39 = scmp.ne.s32.totalorder %s31, %s34
      %p40 = scmp.eq.s32.totalorder %s21, 0
      %p41 = por %p39, %p40
      %p42 = scmp.ne.s32.totalorder %s31, %s34
      %p43 = scmp.eq.s32.totalorder %s26, 3
      %p44 = por %p42, %p43
      %p45 = scmp.ne.s32.totalorder %s34, %s35
      %p46 = scmp.eq.s32.totalorder %s26, 0
      %p47 = por %p45, %p46
      %p48 = scmp.ne.s32.totalorder %s34, %s35
      %p49 = scmp.eq.s32.totalorder %s27, 3
      %p50 = por %p48, %p49
      %p52 = scmp.ne.s32.totalorder %s35, %s51
      %p53 = scmp.eq.s32.totalorder %s27, 0
      %p54 = por %p52, %p53
      %s56 = sadd.s32 %s55, 1
      %p59 = scmp.eq.s32.totalorder %s21, 3
      %p60 = scmp.ne.s32.totalorder %s55, %s57
      %p61 = scmp.eq.s32.totalorder %s21, 0
      %p62 = por %p60, %p61
      %p63 = scmp.ne.s32.totalorder %s55, %s57
      %p64 = scmp.eq.s32.totalorder %s26, 3
      %p65 = por %p63, %p64
      %p66 = scmp.ne.s32.totalorder %s57, %s58
      %p67 = scmp.eq.s32.totalorder %s26, 0
      %p68 = por %p66, %p67
      %p69 = scmp.ne.s32.totalorder %s57, %s58
      %p70 = scmp.eq.s32.totalorder %s27, 3
      %p71 = por %p69, %p70
      %p73 = scmp.ne.s32.totalorder %s58, %s72
      %p74 = scmp.eq.s32.totalorder %s27, 0
      %p75 = por %p73, %p74
      %s77 = sadd.s32 %s76, 1
      %p80 = scmp.eq.s32.totalorder %s21, 3
      %p81 = scmp.ne.s32.totalorder %s76, %s78
      %p82 = scmp.eq.s32.totalorder %s21, 0
      %p83 = por %p81, %p82
      %p84 = scmp.ne.s32.totalorder %s76, %s78
      %p85 = scmp.eq.s32.totalorder %s26, 3
      %p86 = por %p84, %p85
      %p87 = scmp.ne.s32.totalorder %s78, %s79
      %p88 = scmp.eq.s32.totalorder %s26, 0
      %p89 = por %p87, %p88
      %p90 = scmp.ne.s32.totalorder %s78, %s79
      %p91 = scmp.eq.s32.totalorder %s27, 3
      %p92 = por %p90, %p91
      %p94 = scmp.ne.s32.totalorder %s79, %s93
      %p95 = scmp.eq.s32.totalorder %s27, 0
      %p96 = por %p94, %p95
      %s97 = ssub.s32 %s21, %s28
      %p98 = scmp.eq.s32.totalorder %s97, 0
      %s100 = sadd.s32 %s99, 1
      %s101 = scalar_select %p98, %s99, %s100
      %p104 = pneg %p98
      %p105 = scmp.eq.s32.totalorder %s21, 3
      %p106 = por %p104, %p105
      %p107 = scmp.ne.s32.totalorder %s99, %s102
      %p108 = scmp.eq.s32.totalorder %s21, 0
      %p109 = por %p107, %p108
      %p110 = scmp.ne.s32.totalorder %s99, %s102
      %p111 = scmp.eq.s32.totalorder %s26, 3
      %p112 = por %p110, %p111
      %p113 = scmp.ne.s32.totalorder %s102, %s103
      %p114 = scmp.eq.s32.totalorder %s26, 0
      %p115 = por %p113, %p114
      %p116 = scmp.ne.s32.totalorder %s102, %s103
      %p117 = scmp.eq.s32.totalorder %s27, 3
      %p118 = por %p116, %p117
      %p120 = scmp.ne.s32.totalorder %s103, %s119
      %p121 = scmp.eq.s32.totalorder %s27, 0
      %p122 = por %p120, %p121
      %s123 = ssub.s32 %s21, %s28
      %p124 = scmp.eq.s32.totalorder %s123, 0
      %s126 = sadd.s32 %s125, 1
      %s127 = scalar_select %p124, %s125, %s126
      %p130 = pneg %p124
      %p131 = scmp.eq.s32.totalorder %s21, 3
      %p132 = por %p130, %p131
      %p133 = scmp.ne.s32.totalorder %s125, %s128
      %p134 = scmp.eq.s32.totalorder %s21, 0
      %p135 = por %p133, %p134
      %p136 = scmp.ne.s32.totalorder %s125, %s128
      %p137 = scmp.eq.s32.totalorder %s26, 3
      %p138 = por %p136, %p137
      %p139 = scmp.ne.s32.totalorder %s128, %s129
      %p140 = scmp.eq.s32.totalorder %s26, 0
      %p141 = por %p139, %p140
      %p142 = scmp.ne.s32.totalorder %s128, %s129
      %p143 = scmp.eq.s32.totalorder %s27, 3
      %p144 = por %p142, %p143
      %p146 = scmp.ne.s32.totalorder %s129, %s145
      %p147 = scmp.eq.s32.totalorder %s27, 0
      %p148 = por %p146, %p147
      %p149 = scmp.le.s32.totalorder 1, %s21
      %p150 = scmp.lt.s32.totalorder %s21, 5
      %p151 = pnand %p149, %p150
      %p152 = pneg %p151
      // Predicated region
      $region9: #{tpu_custom_call.1} parent=5 // pred_check
        _
      $region10: #{tpu_custom_call.1} parent=5 // pred_check_branch
        %154 = sbr.rel (%p151) target = $region12
      $region11: #{tpu_custom_call.1} parent=5 // pred_region
        %s155 = ssub.s32 %s21, 1
        // Predicated region
        $region13: #{tpu_custom_call.1} parent=11 // pred_check
          %p156 = pneg %p68
        $region14: #{tpu_custom_call.1} parent=11 // pred_check_branch
          %158 = sbr.rel (%p156) target = $region16
        $region15: #{tpu_custom_call.1} parent=11 // pred_region
          %s160 = ssub.s32 1024, 1024
          %161 = vsyncadd [#allocation6], %s160
          %s162 = sshll.u32 [#allocation5], 4
          %s163 = int_to_ptr.vmem [resolvable:$true] %s162
          %168 = dma.hbm_to_vmem [thread:$0]  %s1, 1024, %s163, [#allocation6], 64, 64, 4
        $region16: #{tpu_custom_call.1} parent=11 // pred_fallthru
          _
        // Predicated region
        $region17: #{tpu_custom_call.1} parent=11 // pred_check
          %p169 = pneg %p89
        $region18: #{tpu_custom_call.1} parent=11 // pred_check_branch
          %171 = sbr.rel (%p169) target = $region20
        $region19: #{tpu_custom_call.1} parent=11 // pred_region
          %s173 = ssub.s32 16, 16
          %174 = vsyncadd [#allocation6], %s173
          %s176 = sshll.u32 [#allocation7], 4
          %s177 = int_to_ptr.vmem [resolvable:$true] %s176
          %179 = dma.hbm_to_vmem [thread:$0]  %s2, 16, %s177, [#allocation6]
        $region20: #{tpu_custom_call.1} parent=11 // pred_fallthru
          _
      $region12: #{tpu_custom_call.1} parent=5 // pred_fallthru
        _
      %p180 = scmp.lt.s32.totalorder %s21, 4
      // Predicated region
      $region21: #{tpu_custom_call.1} parent=5 // pred_check
        %p181 = pneg %p180
      $region22: #{tpu_custom_call.1} parent=5 // pred_check_branch
        %183 = sbr.rel (%p181) target = $region24
      $region23: #{tpu_custom_call.1} parent=5 // pred_region
        // Predicated region
        $region25: #{tpu_custom_call.1} parent=23 // pred_check
          %p184 = pneg %p41
        $region26: #{tpu_custom_call.1} parent=23 // pred_check_branch
          %186 = sbr.rel (%p184) target = $region28
        $region27: #{tpu_custom_call.1} parent=23 // pred_region
          %s187 = sand.u32 %s31, 1
          %s188 = scalar_lea.sflag [#allocation3], %s187
          %s189 = sand.u32 %s31, 1
          %s190 = smul.addr %s189, 32
          %s191 = scalar_lea.vmem [#allocation2], %s190
          %s192 = smul.u32 8, %s21
          %s194 = ssub.s32 512, 512
          %195 = vsyncadd %s188, %s194
          %s196 = smul.addr %s192, 64
          %s197 = scalar_lea.hbm %s0, %s196
          %s198 = sshll.u32 %s191, 4
          %s199 = int_to_ptr.vmem [resolvable:$true] %s198
          %204 = dma.hbm_to_vmem [thread:$0]  %s197, 512, %s199, %s188, 64, 64, 4
        $region28: #{tpu_custom_call.1} parent=23 // pred_fallthru
          _
      $region24: #{tpu_custom_call.1} parent=5 // pred_fallthru
        _
      %p205 = scmp.le.s32.totalorder 1, %s21
      %p206 = scmp.lt.s32.totalorder %s21, 5
      %p207 = pnand %p205, %p206
      %p208 = pneg %p207
      // Predicated region
      $region29: #{tpu_custom_call.1} parent=5 // pred_check
        _
      $region30: #{tpu_custom_call.1} parent=5 // pred_check_branch
        %210 = sbr.rel (%p207) target = $region32
      $region31: #{tpu_custom_call.1} parent=5 // pred_region
        %s211 = ssub.s32 %s21, 1
        %s212 = sand.u32 %s34, 1
        %s213 = scalar_lea.sflag [#allocation3], %s212
        %s214 = sand.u32 %s34, 1
        %s215 = smul.addr %s214, 32
        %s216 = scalar_lea.vmem [#allocation2], %s215
        // Predicated region
        $region33: #{tpu_custom_call.1} parent=31 // pred_check
          %p217 = pneg %p47
        $region34: #{tpu_custom_call.1} parent=31 // pred_check_branch
          %219 = sbr.rel (%p217) target = $region36
        $region35: #{tpu_custom_call.1} parent=31 // pred_region
          %220 = dma.done %s213, 512
        $region36: #{tpu_custom_call.1} parent=31 // pred_fallthru
          _
        // Predicated region
        $region37: #{tpu_custom_call.1} parent=31 // pred_check
          %p221 = pneg %p68
        $region38: #{tpu_custom_call.1} parent=31 // pred_check_branch
          %223 = sbr.rel (%p221) target = $region40
        $region39: #{tpu_custom_call.1} parent=31 // pred_region
          %224 = dma.done [#allocation6], 1024
        $region40: #{tpu_custom_call.1} parent=31 // pred_fallthru
          _
        // Predicated region
        $region41: #{tpu_custom_call.1} parent=31 // pred_check
          %p225 = pneg %p89
        $region42: #{tpu_custom_call.1} parent=31 // pred_check_branch
          %227 = sbr.rel (%p225) target = $region44
        $region43: #{tpu_custom_call.1} parent=31 // pred_region
          %228 = dma.done [#allocation6], 16
        $region44: #{tpu_custom_call.1} parent=31 // pred_fallthru
          _
        %s229 = sand.u32 %s34, 1
        %s230 = scalar_lea.sflag [#allocation3], %s229
        %s231 = sand.u32 %s34, 1
        %s232 = smul.addr %s231, 32
        %s233 = scalar_lea.vmem [#allocation2], %s232
        %p234 = pneg %p47
        %p235 = pneg %p44
        %p236 = pneg %p68
        %p237 = pneg %p65
        %p238 = pneg %p89
        %p239 = pneg %p86
        %p240 = pneg %p115
        %p241 = pneg %p112
        %s242 = sand.u32 %s102, 1
        %s243 = scalar_lea.sflag [#allocation4], %s242
        %s244 = sand.u32 %s102, 1
        %s245 = smul.addr %s244, 32
        %s246 = scalar_lea.vmem [#allocation8], %s245
        %p247 = pneg %p141
        %p248 = pneg %p138
        %s249 = sand.u32 %s128, 1
        %s250 = scalar_lea.sflag [#allocation10], %s249
        %s251 = sand.u32 %s128, 1
        %s252 = smul.addr %s251, 2
        %s253 = scalar_lea.vmem [#allocation9], %s252
        %s254 = smul.u32 8, %s26
        %s255 = smul.u32 8, %s26
        %v257 = vld [vmem:[%s216] sm:$0xf]
        %v258 = vld [vmem:[%s216 + $0x4] sm:$0xf]
        %v259 = vld [vmem:[%s216 + $0x8] sm:$0xf]
        %v260 = vld [vmem:[%s216 + $0xc] sm:$0xf]
        %v261 = vld [vmem:[%s216 + $0x10] sm:$0xf]
        %v262 = vld [vmem:[%s216 + $0x14] sm:$0xf]
        %v263 = vld [vmem:[%s216 + $0x18] sm:$0xf]
        %v264 = vld [vmem:[%s216 + $0x1c] sm:$0xf]
        %v265 = vld [vmem:[#allocation5] sm:$0xf]
        %v266 = vld [vmem:[#allocation5 + $0x4] sm:$0xf]
        %v267 = vld [vmem:[#allocation5 + $0x8] sm:$0xf]
        %v268 = vld [vmem:[#allocation5 + $0xc] sm:$0xf]
        %v269 = vld [vmem:[#allocation5 + $0x10] sm:$0xf]
        %v270 = vld [vmem:[#allocation5 + $0x14] sm:$0xf]
        %v271 = vld [vmem:[#allocation5 + $0x18] sm:$0xf]
        %v272 = vld [vmem:[#allocation5 + $0x1c] sm:$0xf]
        %v273 = vld [vmem:[#allocation5 + $0x20] sm:$0xf]
        %v274 = vld [vmem:[#allocation5 + $0x24] sm:$0xf]
        %v275 = vld [vmem:[#allocation5 + $0x28] sm:$0xf]
        %v276 = vld [vmem:[#allocation5 + $0x2c] sm:$0xf]
        %v277 = vld [vmem:[#allocation5 + $0x30] sm:$0xf]
        %v278 = vld [vmem:[#allocation5 + $0x34] sm:$0xf]
        %v279 = vld [vmem:[#allocation5 + $0x38] sm:$0xf]
        %v280 = vld [vmem:[#allocation5 + $0x3c] sm:$0xf]
        %v281 = vld [vmem:[#allocation7] sm:$0x1]
        %v283 = vlaneseq
        %v284 = vshrl.u32 %v283, 7
        %v285 = vsub.s32 0, %v284
        %v286 = vrot.slane %v281, %v285
        %v296 = vunpack.c.l.b16 %v257
        %v297 = vunpack.c.l.b16 %v258
        %v298 = vunpack.c.l.b16 %v259
        %v299 = vunpack.c.l.b16 %v260
        %v300 = vunpack.c.l.b16 %v261
        %v301 = vunpack.c.l.b16 %v262
        %v302 = vunpack.c.l.b16 %v263
        %v303 = vunpack.c.l.b16 %v264
        %v304 = vpack.c.b16 %v297, %v296
        %v305 = vpack.c.b16 %v299, %v298
        %v306 = vpack.c.b16 %v301, %v300
        %v307 = vpack.c.b16 %v303, %v302
        %v328 = vunpack.c.l.b16 %v265
        %v329 = vunpack.c.l.b16 %v266
        %v330 = vunpack.c.l.b16 %v267
        %v331 = vunpack.c.l.b16 %v268
        %v332 = vunpack.c.l.b16 %v269
        %v333 = vunpack.c.l.b16 %v270
        %v334 = vunpack.c.l.b16 %v271
        %v335 = vunpack.c.l.b16 %v272
        %v336 = vunpack.c.l.b16 %v273
        %v337 = vunpack.c.l.b16 %v274
        %v338 = vunpack.c.l.b16 %v275
        %v339 = vunpack.c.l.b16 %v276
        %v340 = vunpack.c.l.b16 %v277
        %v341 = vunpack.c.l.b16 %v278
        %v342 = vunpack.c.l.b16 %v279
        %v343 = vunpack.c.l.b16 %v280
        %v344 = vpack.c.b16 %v329, %v328
        %v345 = vpack.c.b16 %v331, %v330
        %v346 = vpack.c.b16 %v333, %v332
        %v347 = vpack.c.b16 %v335, %v334
        %v348 = vpack.c.b16 %v337, %v336
        %v349 = vpack.c.b16 %v339, %v338
        %v350 = vpack.c.b16 %v341, %v340
        %v351 = vpack.c.b16 %v343, %v342
        %360 = vmatprep.subr.bf16.mxu0 0
        %361 = vmatpush1.bf16.msra.mxu0 %v344
        %362 = vmatprep.subr.bf16.mxu0 0
        %363 = vmatpush1.bf16.msra.mxu0 %v345
        %364 = vmatprep.subr.bf16.mxu0 0
        %365 = vmatpush1.bf16.msra.mxu0 %v346
        %366 = vmatprep.subr.bf16.mxu0 0
        %367 = vmatpush1.bf16.msra.mxu0 %v347
        %368 = vmatprep.subr.bf16.mxu0 0
        %369 = vmatpush1.bf16.msra.mxu0 %v348
        %370 = vmatprep.subr.bf16.mxu0 0
        %371 = vmatpush1.bf16.msra.mxu0 %v349
        %372 = vmatprep.subr.bf16.mxu0 0
        %373 = vmatpush1.bf16.msra.mxu0 %v350
        %374 = vmatprep.subr.bf16.mxu0 0
        %375 = vmatpush1.bf16.msra.mxu0 %v351
        %376 = vmatprep.subr.bf16.mxu0 0
        %377 = vmatpush1.bf16.msra.mxu0 0
        %378 = vmatprep.subr.bf16.mxu0 0
        %379 = vmatpush1.bf16.msra.mxu0 0
        %380 = vmatprep.subr.bf16.mxu0 0
        %381 = vmatpush1.bf16.msra.mxu0 0
        %382 = vmatprep.subr.bf16.mxu0 0
        %383 = vmatpush1.bf16.msra.mxu0 0
        %384 = vmatprep.subr.bf16.mxu0 0
        %385 = vmatpush1.bf16.msra.mxu0 0
        %386 = vmatprep.subr.bf16.mxu0 0
        %387 = vmatpush1.bf16.msra.mxu0 0
        %388 = vmatprep.subr.bf16.mxu0 0
        %389 = vmatpush1.bf16.msra.mxu0 0
        %390 = vmatprep.subr.bf16.mxu0 0
        %391 = vmatpush1.bf16.msra.mxu0 0
        %392 = vmatprep.mubr.bf16.mxu0 0
        %393 = vmatmul.mubr.bf16.gmra.mrb[0].mxu0 %v304
        %v394 = vpop.f32.mrb[0].mxu0
        %v395 = vadd.f32 %v286, %v394
        %v396 = vpop.f32.mrb[0].mxu0
        %v397 = vpop.f32.mrb[0].mxu0
        %v398 = vadd.f32 %v286, %v397
        %v399 = vpop.f32.mrb[0].mxu0
        %400 = vmatprep.mubr.bf16.mxu0 0
        %401 = vmatmul.mubr.bf16.gmra.mrb[0].mxu0 %v305
        %v402 = vpop.f32.mrb[0].mxu0
        %v403 = vadd.f32 %v286, %v402
        %v404 = vpop.f32.mrb[0].mxu0
        %v405 = vpop.f32.mrb[0].mxu0
        %v406 = vadd.f32 %v286, %v405
        %v407 = vpop.f32.mrb[0].mxu0
        %408 = vmatprep.mubr.bf16.mxu0 0
        %409 = vmatmul.mubr.bf16.gmra.mrb[0].mxu0 %v306
        %v410 = vpop.f32.mrb[0].mxu0
        %v411 = vadd.f32 %v286, %v410
        %v412 = vpop.f32.mrb[0].mxu0
        %v413 = vpop.f32.mrb[0].mxu0
        %v414 = vadd.f32 %v286, %v413
        %v415 = vpop.f32.mrb[0].mxu0
        %416 = vmatprep.mubr.bf16.mxu0 0
        %417 = vmatmul.mubr.bf16.gmra.mrb[0].mxu0 %v307
        %v418 = vpop.f32.mrb[0].mxu0
        %v419 = vadd.f32 %v286, %v418
        %v420 = vpop.f32.mrb[0].mxu0
        %v421 = vpop.f32.mrb[0].mxu0
        %v422 = vadd.f32 %v286, %v421
        %v423 = vpop.f32.mrb[0].mxu0
        %424 = vdwg.mxu0
        %v425 = vpack.c.bf16 %v398, %v395
        %v426 = vpack.c.bf16 %v406, %v403
        %v427 = vpack.c.bf16 %v414, %v411
        %v428 = vpack.c.bf16 %v422, %v419
        %v433 = vunpack.c.l.b16 %v425
        %v434 = vunpack.c.h.b16 %v425
        %v435 = vunpack.c.l.b16 %v426
        %v436 = vunpack.c.h.b16 %v426
        %v437 = vunpack.c.l.b16 %v427
        %v438 = vunpack.c.h.b16 %v427
        %v439 = vunpack.c.l.b16 %v428
        %v440 = vunpack.c.h.b16 %v428
        %v441 = vpack.c.b16 %v433, %v433
        %v442 = vpack.c.b16 %v434, %v434
        %v443 = vpack.c.b16 %v435, %v435
        %v444 = vpack.c.b16 %v436, %v436
        %v445 = vpack.c.b16 %v437, %v437
        %v446 = vpack.c.b16 %v438, %v438
        %v447 = vpack.c.b16 %v439, %v439
        %v448 = vpack.c.b16 %v440, %v440
        %457 = vst [vmem:[%s246] sm:$0xf] %v441
        %458 = vst [vmem:[%s246 + $0x4] sm:$0xf] %v442
        %459 = vst [vmem:[%s246 + $0x8] sm:$0xf] %v443
        %460 = vst [vmem:[%s246 + $0xc] sm:$0xf] %v444
        %461 = vst [vmem:[%s246 + $0x10] sm:$0xf] %v445
        %462 = vst [vmem:[%s246 + $0x14] sm:$0xf] %v446
        %463 = vst [vmem:[%s246 + $0x18] sm:$0xf] %v447
        %464 = vst [vmem:[%s246 + $0x1c] sm:$0xf] %v448
        %v465 = vadd.f32 %v395, %v398
        %v466 = vadd.f32 %v465, %v403
        %v467 = vadd.f32 %v466, %v406
        %v468 = vadd.f32 %v467, %v411
        %v469 = vadd.f32 %v468, %v414
        %v470 = vadd.f32 %v469, %v419
        %v471 = vadd.f32 %v470, %v422
        %v472 = vrot.slane %v471, 4
        %v473 = vadd.f32 %v471, %v472
        %v474 = vrot.slane %v473, 2
        %v475 = vadd.f32 %v473, %v474
        %v476 = vrot.slane %v475, 1
        %v477 = vadd.f32 %v475, %v476
        %v478 = vmul.f32 %v395, %v395
        %v479 = vmul.f32 %v398, %v398
        %v480 = vmul.f32 %v403, %v403
        %v481 = vmul.f32 %v406, %v406
        %v482 = vmul.f32 %v411, %v411
        %v483 = vmul.f32 %v414, %v414
        %v484 = vmul.f32 %v419, %v419
        %v485 = vmul.f32 %v422, %v422
        %v486 = vadd.f32 %v478, %v479
        %v487 = vadd.f32 %v486, %v480
        %v488 = vadd.f32 %v487, %v481
        %v489 = vadd.f32 %v488, %v482
        %v490 = vadd.f32 %v489, %v483
        %v491 = vadd.f32 %v490, %v484
        %v492 = vadd.f32 %v491, %v485
        %v493 = vrot.slane %v492, 4
        %v494 = vadd.f32 %v492, %v493
        %v495 = vrot.slane %v494, 2
        %v496 = vadd.f32 %v494, %v495
        %v497 = vrot.slane %v496, 1
        %v498 = vadd.f32 %v496, %v497
        %vm499 = vcmask 1040384
        %v500 = vsel %vm499, %v477, %v498
        %501 = vst [vmem:[%s253] sm:$0x3] %v500
        %s502 = sand.u32 %s102, 1
        %s503 = scalar_lea.sflag [#allocation4], %s502
        %s504 = sand.u32 %s102, 1
        %s505 = smul.addr %s504, 32
        %s506 = scalar_lea.vmem [#allocation8], %s505
        %s507 = sand.u32 %s128, 1
        %s508 = scalar_lea.sflag [#allocation10], %s507
        %s509 = sand.u32 %s128, 1
        %s510 = smul.addr %s509, 2
        %s511 = scalar_lea.vmem [#allocation9], %s510
        // Predicated region
        $region45: #{tpu_custom_call.1} parent=31 // pred_check
          %p512 = pneg %p112
        $region46: #{tpu_custom_call.1} parent=31 // pred_check_branch
          %514 = sbr.rel (%p512) target = $region48
        $region47: #{tpu_custom_call.1} parent=31 // pred_region
          %s515 = smul.u32 8, %s26
          %s517 = ssub.s32 512, 512
          %518 = vsyncadd %s503, %s517
          %s519 = smul.addr %s515, 64
          %s520 = scalar_lea.hbm %s3, %s519
          %s521 = sshll.u32 %s506, 4
          %s522 = int_to_ptr.vmem [resolvable:$true] %s521
          %527 = dma.vmem_to_hbm [thread:$0]  %s522, 512, %s520, %s503, 64, 64, 4
        $region48: #{tpu_custom_call.1} parent=31 // pred_fallthru
          _
        // Predicated region
        $region49: #{tpu_custom_call.1} parent=31 // pred_check
          %p528 = pneg %p138
        $region50: #{tpu_custom_call.1} parent=31 // pred_check_branch
          %530 = sbr.rel (%p528) target = $region52
        $region51: #{tpu_custom_call.1} parent=31 // pred_region
          %s532 = ssub.s32 32, 32
          %533 = vsyncadd %s508, %s532
          %s534 = smul.addr %s26, 32
          %s535 = scalar_lea.hbm %s4, %s534
          %s537 = sshll.u32 %s511, 4
          %s538 = int_to_ptr.vmem [resolvable:$true] %s537
          %540 = dma.vmem_to_hbm [thread:$0]  %s538, 32, %s535, %s508
        $region52: #{tpu_custom_call.1} parent=31 // pred_fallthru
          _
      $region32: #{tpu_custom_call.1} parent=5 // pred_fallthru
        _
      %p541 = scmp.le.s32.totalorder 2, %s21
      // Predicated region
      $region53: #{tpu_custom_call.1} parent=5 // pred_check
        %p542 = pneg %p541
      $region54: #{tpu_custom_call.1} parent=5 // pred_check_branch
        %544 = sbr.rel (%p542) target = $region56
      $region55: #{tpu_custom_call.1} parent=5 // pred_region
        %s545 = ssub.s32 %s21, 2
        // Predicated region
        $region57: #{tpu_custom_call.1} parent=55 // pred_check
          %p546 = pneg %p118
        $region58: #{tpu_custom_call.1} parent=55 // pred_check_branch
          %548 = sbr.rel (%p546) target = $region60
        $region59: #{tpu_custom_call.1} parent=55 // pred_region
          %s549 = sand.u32 %s103, 1
          %s550 = scalar_lea.sflag [#allocation4], %s549
          %s551 = sand.u32 %s103, 1
          %s552 = smul.addr %s551, 32
          %s553 = scalar_lea.vmem [#allocation8], %s552
          %554 = dma.done %s550, 512
        $region60: #{tpu_custom_call.1} parent=55 // pred_fallthru
          _
        // Predicated region
        $region61: #{tpu_custom_call.1} parent=55 // pred_check
          %p555 = pneg %p144
        $region62: #{tpu_custom_call.1} parent=55 // pred_check_branch
          %557 = sbr.rel (%p555) target = $region64
        $region63: #{tpu_custom_call.1} parent=55 // pred_region
          %s558 = sand.u32 %s129, 1
          %s559 = scalar_lea.sflag [#allocation10], %s558
          %s560 = sand.u32 %s129, 1
          %s561 = smul.addr %s560, 2
          %s562 = scalar_lea.vmem [#allocation9], %s561
          %563 = dma.done %s559, 32
        $region64: #{tpu_custom_call.1} parent=55 // pred_fallthru
          _
      $region56: #{tpu_custom_call.1} parent=5 // pred_fallthru
        _
    $region6: #{tpu_custom_call.1} parent=1 // loop_footer
      %s25 = sadd.s32 1, %s21
    $region7: #{tpu_custom_call.1} parent=1 // loop_footer_branch
      %20 = sbr.rel target = $region3
    $region8: #{tpu_custom_call.1} parent=1 // loop_exit
      _
    %564 = vsyncpa [#allocation3], 1
    %s565 = scalar_lea.sflag [#allocation3], 1
    %566 = vsyncpa %s565, 1
    %567 = vsyncpa [#allocation6], 1
    %568 = vsyncpa [#allocation4], 1
    %s569 = scalar_lea.sflag [#allocation4], 1
    %570 = vsyncpa %s569, 1
    %571 = vsyncpa [#allocation10], 1
    %s572 = scalar_lea.sflag [#allocation10], 1
    %573 = vsyncpa %s572, 1

</llo_original>
